<compile_context>
chip_gen: v5e
topology: v5e:2x2
jax: 0.10.0
libtpu: 0.0.40
codegen_flags: <defaults>
</compile_context>

<pallas_src>
import functools

import jax
import jax.numpy as jnp
from jax.experimental import pallas as pl
from jax.experimental.pallas import tpu as pltpu


def _round_up(a, m):
    return (a + m - 1) // m * m


def _classifier_kernel(x_ref, w1_ref, b1_ref, w2_ref, b2_ref, label_ref,
                       out_ref, *, class_num):
    # x: (TB, D) f32 -> cast to bf16 in-kernel (cheaper than a wrapper copy).
    x = x_ref[...].astype(jnp.bfloat16)
    h = jnp.dot(x, w1_ref[...], preferred_element_type=jnp.float32)
    h = jnp.maximum(h + b1_ref[...], 0.0)                    # bias + ReLU (f32, VPU)

    # Second matmul: bf16 operands, f32 accumulation, lane-dense KP output.
    logits = jnp.dot(h.astype(jnp.bfloat16), w2_ref[...],
                     preferred_element_type=jnp.float32) + b2_ref[...]

    # Per-sample cross-entropy over the K real classes only.
    col_ids = jax.lax.broadcasted_iota(jnp.int32, logits.shape, 1)
    valid = col_ids < class_num
    neg = jnp.float32(-1e30)
    m = jnp.max(jnp.where(valid, logits, neg), axis=-1, keepdims=True)
    p = jnp.where(valid, jnp.exp(logits - m), 0.0)
    lse = m + jnp.log(jnp.sum(p, axis=-1, keepdims=True))    # (TB, 1)
    labels = label_ref[...]                                  # (TB, 1) int32
    picked = jnp.sum(jnp.where(col_ids == labels, logits, 0.0),
                     axis=-1, keepdims=True)                 # (TB, 1)
    ploss = lse - picked                                     # per-sample NLL

    # Columns [K, KP) of `logits` are exactly 0 (zero-padded W2/b2), so the
    # per-sample loss can be dropped into column K of the same slab.
    out_ref[...] = logits + ploss * (col_ids == class_num).astype(jnp.float32)


def _choose_tb(B, D, H, KP):
    """Batch tile from a 32 MiB VMEM budget (safe on v5e/v6e/v7x)."""
    budget = 32 << 20
    resident = D * H * 2 + H * 4 + H * KP * 2 + KP * 4 + (1 << 20)  # weights + slack
    per_row = 2 * D * 4 + 2 * KP * 4 + 2 * 4 + H * 8  # x/out double-buffered + h scratch
    cap = max((budget - resident) // per_row, 8)
    cap = max(min(int(cap) // 8 * 8, 2048), 8)
    if B <= 8:
        return 8
    if B <= 2 * cap:
        # aim for >=2 grid steps so v7x can shard the batch across both TCs
        return min(_round_up(pl.cdiv(B, 2), 8), cap)
    return cap


def classifier_forward(x, label, params):
    """Pallas equivalent of classifier.forward(x, label) -> (logits, loss, logits)."""
    B, C, L = x.shape
    w1, b1, w2, b2 = params
    D = C * L
    H = w1.shape[1]
    K = w2.shape[1]
    KP = _round_up(K + 1, 128)        # lane-dense output width; loss lives in col K

    TB = _choose_tb(B, D, H, KP)
    B_pad = _round_up(B, TB)
    grid = (B_pad // TB,)

    x2 = x.reshape(B, D)              # no dtype cast, no unconditional pad copy
    label2 = label.reshape(B, 1).astype(jnp.int32)
    if B_pad != B:                    # pad only the ragged case
        x2 = jnp.pad(x2, ((0, B_pad - B), (0, 0)))
        label2 = jnp.pad(label2, ((0, B_pad - B), (0, 0)))

    w1b = w1.astype(jnp.bfloat16)
    b1r = b1.reshape(1, H).astype(jnp.float32)
    w2p = jnp.pad(w2.astype(jnp.bfloat16), ((0, 0), (0, KP - K)))
    b2p = jnp.pad(b2.reshape(1, K).astype(jnp.float32), ((0, 0), (0, KP - K)))

    # Explicit scoped-VMEM limit sized for the chosen TB (defaults are 16/32 MiB).
    vmem_needed = (2 * TB * D * x2.dtype.itemsize      # x tile, double-buffered
                   + D * H * 2 + H * 4                 # W1 (single-buffered), b1
                   + H * KP * 2 + KP * 4               # W2 pad, b2 pad
                   + 2 * TB * KP * 4                   # output slab, double-buffered
                   + 2 * TB * 4                        # labels
                   + 2 * TB * H * 4)                   # h temporaries
    vmem_limit = int(min(max(vmem_needed * 3 // 2 + (4 << 20), 32 << 20), 64 << 20))

    kernel = functools.partial(_classifier_kernel, class_num=K)

    def _resident(shape):             # grid-invariant weight: single-buffered
        return pl.BlockSpec(shape, lambda i: (0, 0), pipeline_mode=pl.Buffered(1))

    out = pl.pallas_call(
        kernel,
        grid=grid,
        out_shape=jax.ShapeDtypeStruct((B_pad, KP), jnp.float32),
        in_specs=[
            pl.BlockSpec((TB, D), lambda i: (i, 0)),   # x tile, pipelined over batch
            _resident((D, H)),                         # W1 (bf16) resident
            _resident((1, H)),                         # b1 resident
            _resident((H, KP)),                        # W2 padded (bf16) resident
            _resident((1, KP)),                        # b2 padded resident
            pl.BlockSpec((TB, 1), lambda i: (i, 0)),   # labels per tile
        ],
        out_specs=pl.BlockSpec((TB, KP), lambda i: (i, 0)),
        compiler_params=pltpu.CompilerParams(
            dimension_semantics=("parallel",),         # shard batch over TCs (v7x)
            vmem_limit_bytes=vmem_limit,
        ),
    )(x2, w1b, b1r, w2p, b2p, label2)

    logits = out[:B, :K]
    loss = jnp.mean(out[:B, K])       # CE default "mean" reduction, finished here
    return logits, loss, logits


def init_params(key, channel_num, class_num):
    """Deterministic init mimicking nn.Linear default U(-1/sqrt(fan_in), +)."""
    d_in = channel_num * 256
    hidden = 256
    k1, k2, k3, k4 = jax.random.split(key, 4)
    bound1 = 1.0 / (d_in ** 0.5)
    bound2 = 1.0 / (hidden ** 0.5)
    w1 = jax.random.uniform(k1, (d_in, hidden), jnp.float32, -bound1, bound1)
    b1 = jax.random.uniform(k2, (hidden,), jnp.float32, -bound1, bound1)
    w2 = jax.random.uniform(k3, (hidden, class_num), jnp.float32, -bound2, bound2)
    b2 = jax.random.uniform(k4, (class_num,), jnp.float32, -bound2, bound2)
    return (w1, b1, w2, b2)


if __name__ == "__main__":
    channel_num = 4
    class_num = 8
    B, L = 2, 256   # forward implies L == 256 (mlp in-dim is channel_num * 256)

    key = jax.random.PRNGKey(0)
    kx, kl, kp = jax.random.split(key, 3)
    x = jax.random.normal(kx, (B, channel_num, L), jnp.float32)
    label = jax.random.randint(kl, (B,), 0, class_num, jnp.int32)
    params = init_params(kp, channel_num, class_num)

    logits, loss, logits_again = classifier_forward(x, label, params)
    jax.block_until_ready((logits, loss, logits_again))

    # Pure-JAX reference with the same bf16-operand / f32-accumulate policy.
    w1, b1, w2, b2 = params
    x_b = x.reshape(B, -1).astype(jnp.bfloat16)
    ref_h = jnp.maximum(
        jnp.dot(x_b, w1.astype(jnp.bfloat16),
                preferred_element_type=jnp.float32) + b1, 0.0)
    ref_logits = jnp.dot(ref_h.astype(jnp.bfloat16), w2.astype(jnp.bfloat16),
                         preferred_element_type=jnp.float32) + b2
    ref_lse = jax.scipy.special.logsumexp(ref_logits, axis=-1)
    ref_loss = jnp.mean(ref_lse - ref_logits[jnp.arange(B), label])

    assert logits.shape == (B, class_num)
    assert jnp.allclose(logits, ref_logits, atol=1e-2, rtol=1e-2)
    assert jnp.allclose(loss, ref_loss, atol=1e-2, rtol=1e-2)
    assert jnp.allclose(logits_again, logits)

    print("KERNEL_OK")
</pallas_src>

<mosaic_0001>
module attributes {stable_mosaic.version = 11 : i64} {
  func.func @_classifier_kernel(%arg0: i32, %arg1: memref<8x1024xf32, #tpu.memory_space<vmem>>, %arg2: memref<1024x256xbf16, #tpu.memory_space<vmem>>, %arg3: memref<1x256xf32, #tpu.memory_space<vmem>>, %arg4: memref<256x128xbf16, #tpu.memory_space<vmem>>, %arg5: memref<1x128xf32, #tpu.memory_space<vmem>>, %arg6: memref<8x1xi32, #tpu.memory_space<vmem>>, %arg7: memref<8x128xf32, #tpu.memory_space<vmem>>) attributes {dimension_semantics = [#tpu.dimension_semantics<parallel>], iteration_bounds = array<i64: 1>, scalar_prefetch = 0 : i64, scratch_operands = 0 : i64, tpu.core_type = #tpu.core_type<tc>, window_params = [{transform_indices = @transform_0, window_bounds = array<i64: 8, 1024>}, {pipeline_mode = #tpu.pipeline_mode<synchronous>, transform_indices = @transform_1, window_bounds = array<i64: 1024, 256>}, {pipeline_mode = #tpu.pipeline_mode<synchronous>, transform_indices = @transform_2, window_bounds = array<i64: 1, 256>}, {pipeline_mode = #tpu.pipeline_mode<synchronous>, transform_indices = @transform_3, window_bounds = array<i64: 256, 128>}, {pipeline_mode = #tpu.pipeline_mode<synchronous>, transform_indices = @transform_4, window_bounds = array<i64: 1, 128>}, {transform_indices = @transform_5, window_bounds = array<i64: 8, 1>}, {transform_indices = @transform_6, window_bounds = array<i64: 8, 128>}]} {
    %c0 = arith.constant 0 : index
    %c0_0 = arith.constant 0 : index
    %0 = vector.load %arg1[%c0, %c0_0] : memref<8x1024xf32, #tpu.memory_space<vmem>>, vector<8x1024xf32>
    %1 = arith.truncf %0 : vector<8x1024xf32> to vector<8x1024xbf16>
    %c0_1 = arith.constant 0 : index
    %c0_2 = arith.constant 0 : index
    %2 = vector.load %arg2[%c0_1, %c0_2] : memref<1024x256xbf16, #tpu.memory_space<vmem>>, vector<1024x256xbf16>
    %cst = arith.constant dense<0.000000e+00> : vector<8x256xf32>
    %3 = tpu.matmul %1, %2, %cst {dimension_numbers = #tpu.dot_dimension_numbers<[1], [0], [0], [1], [0, 0, 1, 1], [], []>} : vector<8x1024xbf16>, vector<1024x256xbf16>, vector<8x256xf32> -> vector<8x256xf32>
    %c0_3 = arith.constant 0 : index
    %c0_4 = arith.constant 0 : index
    %4 = vector.load %arg3[%c0_3, %c0_4] : memref<1x256xf32, #tpu.memory_space<vmem>>, vector<1x256xf32>
    %5 = vector.broadcast %4 : vector<1x256xf32> to vector<8x256xf32>
    %6 = arith.addf %3, %5 : vector<8x256xf32>
    %cst_5 = arith.constant 0.000000e+00 : f32
    %7 = vector.broadcast %cst_5 : f32 to vector<8x256xf32>
    %8 = arith.maximumf %6, %7 : vector<8x256xf32>
    %9 = arith.truncf %8 : vector<8x256xf32> to vector<8x256xbf16>
    %c0_6 = arith.constant 0 : index
    %c0_7 = arith.constant 0 : index
    %10 = vector.load %arg4[%c0_6, %c0_7] : memref<256x128xbf16, #tpu.memory_space<vmem>>, vector<256x128xbf16>
    %cst_8 = arith.constant dense<0.000000e+00> : vector<8x128xf32>
    %11 = tpu.matmul %9, %10, %cst_8 {dimension_numbers = #tpu.dot_dimension_numbers<[1], [0], [0], [1], [0, 0, 1, 1], [], []>} : vector<8x256xbf16>, vector<256x128xbf16>, vector<8x128xf32> -> vector<8x128xf32>
    %c0_9 = arith.constant 0 : index
    %c0_10 = arith.constant 0 : index
    %12 = vector.load %arg5[%c0_9, %c0_10] : memref<1x128xf32, #tpu.memory_space<vmem>>, vector<1x128xf32>
    %13 = vector.broadcast %12 : vector<1x128xf32> to vector<8x128xf32>
    %14 = arith.addf %11, %13 : vector<8x128xf32>
    %15 = tpu.iota {dimensions = array<i32: 1>} : vector<8x128xi32>
    %c8_i32 = arith.constant 8 : i32
    %16 = vector.broadcast %c8_i32 : i32 to vector<8x128xi32>
    %17 = arith.cmpi slt, %15, %16 : vector<8x128xi32>
    %cst_11 = arith.constant -1.000000e+30 : f32
    %18 = vector.broadcast %cst_11 : f32 to vector<8x128xf32>
    %19 = arith.select %17, %14, %18 : vector<8x128xi1>, vector<8x128xf32>
    %cst_12 = arith.constant dense<0xFF800000> : vector<8xf32>
    %20 = vector.multi_reduction <maximumf>, %19, %cst_12 [1] : vector<8x128xf32> to vector<8xf32>
    %21 = vector.shape_cast %20 : vector<8xf32> to vector<8x1xf32>
    %22 = vector.broadcast %21 : vector<8x1xf32> to vector<8x128xf32>
    %23 = arith.subf %14, %22 : vector<8x128xf32>
    %24 = math.exp %23 : vector<8x128xf32>
    %cst_13 = arith.constant 0.000000e+00 : f32
    %25 = vector.broadcast %cst_13 : f32 to vector<8x128xf32>
    %26 = arith.select %17, %24, %25 : vector<8x128xi1>, vector<8x128xf32>
    %cst_14 = arith.constant dense<0.000000e+00> : vector<8xf32>
    %27 = vector.multi_reduction <add>, %26, %cst_14 [1] : vector<8x128xf32> to vector<8xf32>
    %28 = vector.shape_cast %27 : vector<8xf32> to vector<8x1xf32>
    %29 = math.log %28 : vector<8x1xf32>
    %30 = arith.addf %21, %29 : vector<8x1xf32>
    %c0_15 = arith.constant 0 : index
    %c0_16 = arith.constant 0 : index
    %31 = vector.load %arg6[%c0_15, %c0_16] : memref<8x1xi32, #tpu.memory_space<vmem>>, vector<8x1xi32>
    %32 = vector.broadcast %31 : vector<8x1xi32> to vector<8x128xi32>
    %33 = arith.cmpi eq, %15, %32 : vector<8x128xi32>
    %cst_17 = arith.constant 0.000000e+00 : f32
    %34 = vector.broadcast %cst_17 : f32 to vector<8x128xf32>
    %35 = arith.select %33, %14, %34 : vector<8x128xi1>, vector<8x128xf32>
    %cst_18 = arith.constant dense<0.000000e+00> : vector<8xf32>
    %36 = vector.multi_reduction <add>, %35, %cst_18 [1] : vector<8x128xf32> to vector<8xf32>
    %37 = vector.shape_cast %36 : vector<8xf32> to vector<8x1xf32>
    %38 = arith.subf %30, %37 : vector<8x1xf32>
    %c8_i32_19 = arith.constant 8 : i32
    %39 = vector.broadcast %c8_i32_19 : i32 to vector<8x128xi32>
    %40 = arith.cmpi eq, %15, %39 : vector<8x128xi32>
    %41 = arith.extui %40 : vector<8x128xi1> to vector<8x128xi32>
    %42 = arith.sitofp %41 : vector<8x128xi32> to vector<8x128xf32>
    %43 = vector.broadcast %38 : vector<8x1xf32> to vector<8x128xf32>
    %44 = arith.mulf %43, %42 : vector<8x128xf32>
    %45 = arith.addf %14, %44 : vector<8x128xf32>
    %c0_20 = arith.constant 0 : index
    %c0_21 = arith.constant 0 : index
    %46 = vector.load %arg7[%c0_20, %c0_21] : memref<8x128xf32, #tpu.memory_space<vmem>>, vector<8x128xf32>
    tpu.vector_store %arg7[%c0_20, %c0_21], %45 {strides = array<i32>} : memref<8x128xf32, #tpu.memory_space<vmem>>, vector<8x128xf32>,
    return
  }
  func.func @transform_0(%arg0: i32) -> (i32, i32) {
    %c0_i32 = arith.constant 0 : i32
    %c0_i32_0 = arith.constant 0 : i32
    return %arg0, %c0_i32 : i32, i32
  }
  func.func @transform_1(%arg0: i32) -> (i32, i32) {
    %c0_i32 = arith.constant 0 : i32
    %c0_i32_0 = arith.constant 0 : i32
    %c0_i32_1 = arith.constant 0 : i32
    return %c0_i32, %c0_i32_0 : i32, i32
  }
  func.func @transform_2(%arg0: i32) -> (i32, i32) {
    %c0_i32 = arith.constant 0 : i32
    %c0_i32_0 = arith.constant 0 : i32
    %c0_i32_1 = arith.constant 0 : i32
    return %c0_i32, %c0_i32_0 : i32, i32
  }
  func.func @transform_3(%arg0: i32) -> (i32, i32) {
    %c0_i32 = arith.constant 0 : i32
    %c0_i32_0 = arith.constant 0 : i32
    %c0_i32_1 = arith.constant 0 : i32
    return %c0_i32, %c0_i32_0 : i32, i32
  }
  func.func @transform_4(%arg0: i32) -> (i32, i32) {
    %c0_i32 = arith.constant 0 : i32
    %c0_i32_0 = arith.constant 0 : i32
    %c0_i32_1 = arith.constant 0 : i32
    return %c0_i32, %c0_i32_0 : i32, i32
  }
  func.func @transform_5(%arg0: i32) -> (i32, i32) {
    %c0_i32 = arith.constant 0 : i32
    %c0_i32_0 = arith.constant 0 : i32
    return %arg0, %c0_i32 : i32, i32
  }
  func.func @transform_6(%arg0: i32) -> (i32, i32) {
    %c0_i32 = arith.constant 0 : i32
    %c0_i32_0 = arith.constant 0 : i32
    return %arg0, %c0_i32 : i32, i32
  }
}

</mosaic_0001>

<llo_original>
// kernel: tpu_custom_call.1
$region0: #{tpu_custom_call.1}
  #allocation0 [shape = 'u32[]', space=smem, size = 0x4, offset = 0x4, fixed_abs, tag = 'smem constant byte address 0x4 - core index']
  #allocation1 [shape = 'u32[72,128]{1,0:T(1,128)}', space=vmem, size = 0x9000, scoped, tag = 'internal scratch']
  %s0 = inlined_call_operand.hbm [shape: f32[8,1024], index: 0, kind: input, shape index: {}]
  %s1 = inlined_call_operand.hbm [shape: bf16[1024,256], index: 1, kind: input, shape index: {}]
  %s2 = inlined_call_operand.vmem [shape: f32[1,256], index: 2, kind: input, shape index: {}]
  %s3 = inlined_call_operand.hbm [shape: bf16[256,128], index: 3, kind: input, shape index: {}]
  %s4 = inlined_call_operand.vmem [shape: f32[1,128], index: 4, kind: input, shape index: {}]
  %s5 = inlined_call_operand.vmem [shape: s32[8,1], index: 5, kind: input, shape index: {}]
  %s6 = inlined_call_operand.hbm [shape: f32[8,128], index: 6, kind: output, shape index: {}]
  %s7 = sld [smem:[#allocation0]]
  $region46: #{tpu_custom_call.1} parent=0
    _
  %s9 = ssub.s32 1, %s7
  %s10 = scalar_select 0, %s9, %s7
  $region1: #{tpu_custom_call.1} parent=0
    #allocation2 [shape = 'u8[32768]{0}', space=vmem, size = 0x8000, scoped, tag = 'input window, operand 0, single buffered']
    #allocation3 [shape = 's32[1]{0}', space=sflag, size = 0x4, scoped, tag = 'scoped memory for tpu_custom_call.1']
    #allocation4 [shape = 's32[1]{0}', space=sflag, size = 0x4, scoped, tag = 'scoped memory for tpu_custom_call.1']
    #allocation5 [shape = 'u8[524288]{0}', space=vmem, size = 0x80000, scoped, tag = 'input window, operand 1, single buffered']
    #allocation6 [shape = 's32[1]{0}', space=sflag, size = 0x4, scoped, tag = 'scoped memory for tpu_custom_call.1']
    #allocation7 [shape = 'u8[65536]{0}', space=vmem, size = 0x10000, scoped, tag = 'input window, operand 3, single buffered']
    #allocation8 [shape = 'u8[4096]{0}', space=vmem, size = 0x1000, scoped, tag = 'output window, operand 0, single buffered']
    %11 = vsyncpa [#allocation3], 0
    %12 = vsyncpa [#allocation6], 0
    %13 = vsyncpa [#allocation4], 0
    // Predicated region
    $region2: #{tpu_custom_call.1} parent=1 // pred_check
      _
    $region3: #{tpu_custom_call.1} parent=1 // pred_check_branch
      %15 = sbr.rel (0) target = $region5
    $region4: #{tpu_custom_call.1} parent=1 // pred_region
      %17 = vsyncadd [#allocation3], 0
      %s19 = sshll.u32 %s0, 4
      %s20 = int_to_ptr.hbm [resolvable:$true] %s19
      %s21 = sshll.u32 [#allocation2], 4
      %s22 = int_to_ptr.vmem [resolvable:$true] %s21
      %24 = dma.hbm_to_vmem [thread:$0]  %s20, 1024, %s22, [#allocation3]
    $region5: #{tpu_custom_call.1} parent=1 // pred_fallthru
      _
    // Predicated region
    $region6: #{tpu_custom_call.1} parent=1 // pred_check
      _
    $region7: #{tpu_custom_call.1} parent=1 // pred_check_branch
      %26 = sbr.rel (0) target = $region9
    $region8: #{tpu_custom_call.1} parent=1 // pred_region
      %28 = vsyncadd [#allocation6], 0
      %s29 = sshll.u32 %s1, 4
      %s30 = int_to_ptr.hbm [resolvable:$true] %s29
      %s31 = sshll.u32 [#allocation5], 4
      %s32 = int_to_ptr.vmem [resolvable:$true] %s31
      %37 = dma.hbm_to_vmem [thread:$0]  %s30, 16384, %s32, [#allocation6], 128, 128, 8
    $region9: #{tpu_custom_call.1} parent=1 // pred_fallthru
      _
    // Predicated region
    $region10: #{tpu_custom_call.1} parent=1 // pred_check
      _
    $region11: #{tpu_custom_call.1} parent=1 // pred_check_branch
      %39 = sbr.rel (0) target = $region13
    $region12: #{tpu_custom_call.1} parent=1 // pred_region
      _
    $region13: #{tpu_custom_call.1} parent=1 // pred_fallthru
      _
    // Predicated region
    $region14: #{tpu_custom_call.1} parent=1 // pred_check
      _
    $region15: #{tpu_custom_call.1} parent=1 // pred_check_branch
      %41 = sbr.rel (0) target = $region17
    $region16: #{tpu_custom_call.1} parent=1 // pred_region
      %43 = vsyncadd [#allocation6], 0
      %s44 = sshll.u32 %s3, 4
      %s45 = int_to_ptr.hbm [resolvable:$true] %s44
      %s46 = sshll.u32 [#allocation7], 4
      %s47 = int_to_ptr.vmem [resolvable:$true] %s46
      %52 = dma.hbm_to_vmem [thread:$0]  %s45, 2048, %s47, [#allocation6], 64, 64, 4
    $region17: #{tpu_custom_call.1} parent=1 // pred_fallthru
      _
    // Predicated region
    $region18: #{tpu_custom_call.1} parent=1 // pred_check
      _
    $region19: #{tpu_custom_call.1} parent=1 // pred_check_branch
      %54 = sbr.rel (0) target = $region21
    $region20: #{tpu_custom_call.1} parent=1 // pred_region
      _
    $region21: #{tpu_custom_call.1} parent=1 // pred_fallthru
      _
    // Predicated region
    $region22: #{tpu_custom_call.1} parent=1 // pred_check
      _
    $region23: #{tpu_custom_call.1} parent=1 // pred_check_branch
      %56 = sbr.rel (0) target = $region25
    $region24: #{tpu_custom_call.1} parent=1 // pred_region
      _
    $region25: #{tpu_custom_call.1} parent=1 // pred_fallthru
      _
    // Predicated region
    $region26: #{tpu_custom_call.1} parent=1 // pred_check
      _
    $region27: #{tpu_custom_call.1} parent=1 // pred_check_branch
      %58 = sbr.rel (0) target = $region29
    $region28: #{tpu_custom_call.1} parent=1 // pred_region
      %60 = dma.done [#allocation3], 1024
    $region29: #{tpu_custom_call.1} parent=1 // pred_fallthru
      _
    // Predicated region
    $region30: #{tpu_custom_call.1} parent=1 // pred_check
      _
    $region31: #{tpu_custom_call.1} parent=1 // pred_check_branch
      %62 = sbr.rel (0) target = $region33
    $region32: #{tpu_custom_call.1} parent=1 // pred_region
      %64 = dma.done [#allocation6], 16384
    $region33: #{tpu_custom_call.1} parent=1 // pred_fallthru
      _
    // Predicated region
    $region34: #{tpu_custom_call.1} parent=1 // pred_check
      _
    $region35: #{tpu_custom_call.1} parent=1 // pred_check_branch
      %66 = sbr.rel (0) target = $region37
    $region36: #{tpu_custom_call.1} parent=1 // pred_region
      %68 = dma.done [#allocation6], 2048
    $region37: #{tpu_custom_call.1} parent=1 // pred_fallthru
      _
    %v69 = vld [vmem:[#allocation2] sm:$0xff]
    %v70 = vld [vmem:[#allocation2 + $0x8] sm:$0xff]
    %v71 = vld [vmem:[#allocation2 + $0x10] sm:$0xff]
    %v72 = vld [vmem:[#allocation2 + $0x18] sm:$0xff]
    %v73 = vld [vmem:[#allocation2 + $0x20] sm:$0xff]
    %v74 = vld [vmem:[#allocation2 + $0x28] sm:$0xff]
    %v75 = vld [vmem:[#allocation2 + $0x30] sm:$0xff]
    %v76 = vld [vmem:[#allocation2 + $0x38] sm:$0xff]
    %v77 = vpack.c.bf16 %v69, %v69
    %v78 = vpack.c.bf16 %v70, %v70
    %v79 = vpack.c.bf16 %v71, %v71
    %v80 = vpack.c.bf16 %v72, %v72
    %v81 = vpack.c.bf16 %v73, %v73
    %v82 = vpack.c.bf16 %v74, %v74
    %v83 = vpack.c.bf16 %v75, %v75
    %v84 = vpack.c.bf16 %v76, %v76
    %v85 = vld [vmem:[#allocation5] sm:$0xff]
    %v86 = vld [vmem:[#allocation5 + $0x8] sm:$0xff]
    %v87 = vld [vmem:[#allocation5 + $0x10] sm:$0xff]
    %v88 = vld [vmem:[#allocation5 + $0x18] sm:$0xff]
    %v89 = vld [vmem:[#allocation5 + $0x20] sm:$0xff]
    %v90 = vld [vmem:[#allocation5 + $0x28] sm:$0xff]
    %v91 = vld [vmem:[#allocation5 + $0x30] sm:$0xff]
    %v92 = vld [vmem:[#allocation5 + $0x38] sm:$0xff]
    %v93 = vld [vmem:[#allocation5 + $0x40] sm:$0xff]
    %v94 = vld [vmem:[#allocation5 + $0x48] sm:$0xff]
    %v95 = vld [vmem:[#allocation5 + $0x50] sm:$0xff]
    %v96 = vld [vmem:[#allocation5 + $0x58] sm:$0xff]
    %v97 = vld [vmem:[#allocation5 + $0x60] sm:$0xff]
    %v98 = vld [vmem:[#allocation5 + $0x68] sm:$0xff]
    %v99 = vld [vmem:[#allocation5 + $0x70] sm:$0xff]
    %v100 = vld [vmem:[#allocation5 + $0x78] sm:$0xff]
    %v101 = vld [vmem:[#allocation5 + $0x80] sm:$0xff]
    %v102 = vld [vmem:[#allocation5 + $0x88] sm:$0xff]
    %v103 = vld [vmem:[#allocation5 + $0x90] sm:$0xff]
    %v104 = vld [vmem:[#allocation5 + $0x98] sm:$0xff]
    %v105 = vld [vmem:[#allocation5 + $0xa0] sm:$0xff]
    %v106 = vld [vmem:[#allocation5 + $0xa8] sm:$0xff]
    %v107 = vld [vmem:[#allocation5 + $0xb0] sm:$0xff]
    %v108 = vld [vmem:[#allocation5 + $0xb8] sm:$0xff]
    %v109 = vld [vmem:[#allocation5 + $0xc0] sm:$0xff]
    %v110 = vld [vmem:[#allocation5 + $0xc8] sm:$0xff]
    %v111 = vld [vmem:[#allocation5 + $0xd0] sm:$0xff]
    %v112 = vld [vmem:[#allocation5 + $0xd8] sm:$0xff]
    %v113 = vld [vmem:[#allocation5 + $0xe0] sm:$0xff]
    %v114 = vld [vmem:[#allocation5 + $0xe8] sm:$0xff]
    %v115 = vld [vmem:[#allocation5 + $0xf0] sm:$0xff]
    %v116 = vld [vmem:[#allocation5 + $0xf8] sm:$0xff]
    %v117 = vld [vmem:[#allocation5 + $0x100] sm:$0xff]
    %v118 = vld [vmem:[#allocation5 + $0x108] sm:$0xff]
    %v119 = vld [vmem:[#allocation5 + $0x110] sm:$0xff]
    %v120 = vld [vmem:[#allocation5 + $0x118] sm:$0xff]
    %v121 = vld [vmem:[#allocation5 + $0x120] sm:$0xff]
    %v122 = vld [vmem:[#allocation5 + $0x128] sm:$0xff]
    %v123 = vld [vmem:[#allocation5 + $0x130] sm:$0xff]
    %v124 = vld [vmem:[#allocation5 + $0x138] sm:$0xff]
    %v125 = vld [vmem:[#allocation5 + $0x140] sm:$0xff]
    %v126 = vld [vmem:[#allocation5 + $0x148] sm:$0xff]
    %v127 = vld [vmem:[#allocation5 + $0x150] sm:$0xff]
    %v128 = vld [vmem:[#allocation5 + $0x158] sm:$0xff]
    %v129 = vld [vmem:[#allocation5 + $0x160] sm:$0xff]
    %v130 = vld [vmem:[#allocation5 + $0x168] sm:$0xff]
    %v131 = vld [vmem:[#allocation5 + $0x170] sm:$0xff]
    %v132 = vld [vmem:[#allocation5 + $0x178] sm:$0xff]
    %v133 = vld [vmem:[#allocation5 + $0x180] sm:$0xff]
    %v134 = vld [vmem:[#allocation5 + $0x188] sm:$0xff]
    %v135 = vld [vmem:[#allocation5 + $0x190] sm:$0xff]
    %v136 = vld [vmem:[#allocation5 + $0x198] sm:$0xff]
    %v137 = vld [vmem:[#allocation5 + $0x1a0] sm:$0xff]
    %v138 = vld [vmem:[#allocation5 + $0x1a8] sm:$0xff]
    %v139 = vld [vmem:[#allocation5 + $0x1b0] sm:$0xff]
    %v140 = vld [vmem:[#allocation5 + $0x1b8] sm:$0xff]
    %v141 = vld [vmem:[#allocation5 + $0x1c0] sm:$0xff]
    %v142 = vld [vmem:[#allocation5 + $0x1c8] sm:$0xff]
    %v143 = vld [vmem:[#allocation5 + $0x1d0] sm:$0xff]
    %v144 = vld [vmem:[#allocation5 + $0x1d8] sm:$0xff]
    %v145 = vld [vmem:[#allocation5 + $0x1e0] sm:$0xff]
    %v146 = vld [vmem:[#allocation5 + $0x1e8] sm:$0xff]
    %v147 = vld [vmem:[#allocation5 + $0x1f0] sm:$0xff]
    %v148 = vld [vmem:[#allocation5 + $0x1f8] sm:$0xff]
    %v149 = vld [vmem:[#allocation5 + $0x200] sm:$0xff]
    %v150 = vld [vmem:[#allocation5 + $0x208] sm:$0xff]
    %v151 = vld [vmem:[#allocation5 + $0x210] sm:$0xff]
    %v152 = vld [vmem:[#allocation5 + $0x218] sm:$0xff]
    %v153 = vld [vmem:[#allocation5 + $0x220] sm:$0xff]
    %v154 = vld [vmem:[#allocation5 + $0x228] sm:$0xff]
    %v155 = vld [vmem:[#allocation5 + $0x230] sm:$0xff]
    %v156 = vld [vmem:[#allocation5 + $0x238] sm:$0xff]
    %v157 = vld [vmem:[#allocation5 + $0x240] sm:$0xff]
    %v158 = vld [vmem:[#allocation5 + $0x248] sm:$0xff]
    %v159 = vld [vmem:[#allocation5 + $0x250] sm:$0xff]
    %v160 = vld [vmem:[#allocation5 + $0x258] sm:$0xff]
    %v161 = vld [vmem:[#allocation5 + $0x260] sm:$0xff]
    %v162 = vld [vmem:[#allocation5 + $0x268] sm:$0xff]
    %v163 = vld [vmem:[#allocation5 + $0x270] sm:$0xff]
    %v164 = vld [vmem:[#allocation5 + $0x278] sm:$0xff]
    %v165 = vld [vmem:[#allocation5 + $0x280] sm:$0xff]
    %v166 = vld [vmem:[#allocation5 + $0x288] sm:$0xff]
    %v167 = vld [vmem:[#allocation5 + $0x290] sm:$0xff]
    %v168 = vld [vmem:[#allocation5 + $0x298] sm:$0xff]
    %v169 = vld [vmem:[#allocation5 + $0x2a0] sm:$0xff]
    %v170 = vld [vmem:[#allocation5 + $0x2a8] sm:$0xff]
    %v171 = vld [vmem:[#allocation5 + $0x2b0] sm:$0xff]
    %v172 = vld [vmem:[#allocation5 + $0x2b8] sm:$0xff]
    %v173 = vld [vmem:[#allocation5 + $0x2c0] sm:$0xff]
    %v174 = vld [vmem:[#allocation5 + $0x2c8] sm:$0xff]
    %v175 = vld [vmem:[#allocation5 + $0x2d0] sm:$0xff]
    %v176 = vld [vmem:[#allocation5 + $0x2d8] sm:$0xff]
    %v177 = vld [vmem:[#allocation5 + $0x2e0] sm:$0xff]
    %v178 = vld [vmem:[#allocation5 + $0x2e8] sm:$0xff]
    %v179 = vld [vmem:[#allocation5 + $0x2f0] sm:$0xff]
    %v180 = vld [vmem:[#allocation5 + $0x2f8] sm:$0xff]
    %v181 = vld [vmem:[#allocation5 + $0x300] sm:$0xff]
    %v182 = vld [vmem:[#allocation5 + $0x308] sm:$0xff]
    %v183 = vld [vmem:[#allocation5 + $0x310] sm:$0xff]
    %v184 = vld [vmem:[#allocation5 + $0x318] sm:$0xff]
    %v185 = vld [vmem:[#allocation5 + $0x320] sm:$0xff]
    %v186 = vld [vmem:[#allocation5 + $0x328] sm:$0xff]
    %v187 = vld [vmem:[#allocation5 + $0x330] sm:$0xff]
    %v188 = vld [vmem:[#allocation5 + $0x338] sm:$0xff]
    %v189 = vld [vmem:[#allocation5 + $0x340] sm:$0xff]
    %v190 = vld [vmem:[#allocation5 + $0x348] sm:$0xff]
    %v191 = vld [vmem:[#allocation5 + $0x350] sm:$0xff]
    %v192 = vld [vmem:[#allocation5 + $0x358] sm:$0xff]
    %v193 = vld [vmem:[#allocation5 + $0x360] sm:$0xff]
    %v194 = vld [vmem:[#allocation5 + $0x368] sm:$0xff]
    %v195 = vld [vmem:[#allocation5 + $0x370] sm:$0xff]
    %v196 = vld [vmem:[#allocation5 + $0x378] sm:$0xff]
    %v197 = vld [vmem:[#allocation5 + $0x380] sm:$0xff]
    %v198 = vld [vmem:[#allocation5 + $0x388] sm:$0xff]
    %v199 = vld [vmem:[#allocation5 + $0x390] sm:$0xff]
    %v200 = vld [vmem:[#allocation5 + $0x398] sm:$0xff]
    %v201 = vld [vmem:[#allocation5 + $0x3a0] sm:$0xff]
    %v202 = vld [vmem:[#allocation5 + $0x3a8] sm:$0xff]
    %v203 = vld [vmem:[#allocation5 + $0x3b0] sm:$0xff]
    %v204 = vld [vmem:[#allocation5 + $0x3b8] sm:$0xff]
    %v205 = vld [vmem:[#allocation5 + $0x3c0] sm:$0xff]
    %v206 = vld [vmem:[#allocation5 + $0x3c8] sm:$0xff]
    %v207 = vld [vmem:[#allocation5 + $0x3d0] sm:$0xff]
    %v208 = vld [vmem:[#allocation5 + $0x3d8] sm:$0xff]
    %v209 = vld [vmem:[#allocation5 + $0x3e0] sm:$0xff]
    %v210 = vld [vmem:[#allocation5 + $0x3e8] sm:$0xff]
    %v211 = vld [vmem:[#allocation5 + $0x3f0] sm:$0xff]
    %v212 = vld [vmem:[#allocation5 + $0x3f8] sm:$0xff]
    %v213 = vld [vmem:[%s2] sm:$0x3]
    %v215 = vperm.slane %v213, 0
    %v216 = vperm.slane %v213, 1
    %v347 = vunpack.c.l.b16 %v85
    %v348 = vunpack.c.h.b16 %v85
    %v349 = vunpack.c.l.b16 %v86
    %v350 = vunpack.c.h.b16 %v86
    %v351 = vunpack.c.l.b16 %v87
    %v352 = vunpack.c.h.b16 %v87
    %v353 = vunpack.c.l.b16 %v88
    %v354 = vunpack.c.h.b16 %v88
    %v355 = vunpack.c.l.b16 %v89
    %v356 = vunpack.c.h.b16 %v89
    %v357 = vunpack.c.l.b16 %v90
    %v358 = vunpack.c.h.b16 %v90
    %v359 = vunpack.c.l.b16 %v91
    %v360 = vunpack.c.h.b16 %v91
    %v361 = vunpack.c.l.b16 %v92
    %v362 = vunpack.c.h.b16 %v92
    %v363 = vunpack.c.l.b16 %v93
    %v364 = vunpack.c.h.b16 %v93
    %v365 = vunpack.c.l.b16 %v94
    %v366 = vunpack.c.h.b16 %v94
    %v367 = vunpack.c.l.b16 %v95
    %v368 = vunpack.c.h.b16 %v95
    %v369 = vunpack.c.l.b16 %v96
    %v370 = vunpack.c.h.b16 %v96
    %v371 = vunpack.c.l.b16 %v97
    %v372 = vunpack.c.h.b16 %v97
    %v373 = vunpack.c.l.b16 %v98
    %v374 = vunpack.c.h.b16 %v98
    %v375 = vunpack.c.l.b16 %v99
    %v376 = vunpack.c.h.b16 %v99
    %v377 = vunpack.c.l.b16 %v100
    %v378 = vunpack.c.h.b16 %v100
    %v379 = vunpack.c.l.b16 %v101
    %v380 = vunpack.c.h.b16 %v101
    %v381 = vunpack.c.l.b16 %v102
    %v382 = vunpack.c.h.b16 %v102
    %v383 = vunpack.c.l.b16 %v103
    %v384 = vunpack.c.h.b16 %v103
    %v385 = vunpack.c.l.b16 %v104
    %v386 = vunpack.c.h.b16 %v104
    %v387 = vunpack.c.l.b16 %v105
    %v388 = vunpack.c.h.b16 %v105
    %v389 = vunpack.c.l.b16 %v106
    %v390 = vunpack.c.h.b16 %v106
    %v391 = vunpack.c.l.b16 %v107
    %v392 = vunpack.c.h.b16 %v107
    %v393 = vunpack.c.l.b16 %v108
    %v394 = vunpack.c.h.b16 %v108
    %v395 = vunpack.c.l.b16 %v109
    %v396 = vunpack.c.h.b16 %v109
    %v397 = vunpack.c.l.b16 %v110
    %v398 = vunpack.c.h.b16 %v110
    %v399 = vunpack.c.l.b16 %v111
    %v400 = vunpack.c.h.b16 %v111
    %v401 = vunpack.c.l.b16 %v112
    %v402 = vunpack.c.h.b16 %v112
    %v403 = vunpack.c.l.b16 %v113
    %v404 = vunpack.c.h.b16 %v113
    %v405 = vunpack.c.l.b16 %v114
    %v406 = vunpack.c.h.b16 %v114
    %v407 = vunpack.c.l.b16 %v115
    %v408 = vunpack.c.h.b16 %v115
    %v409 = vunpack.c.l.b16 %v116
    %v410 = vunpack.c.h.b16 %v116
    %v411 = vunpack.c.l.b16 %v117
    %v412 = vunpack.c.h.b16 %v117
    %v413 = vunpack.c.l.b16 %v118
    %v414 = vunpack.c.h.b16 %v118
    %v415 = vunpack.c.l.b16 %v119
    %v416 = vunpack.c.h.b16 %v119
    %v417 = vunpack.c.l.b16 %v120
    %v418 = vunpack.c.h.b16 %v120
    %v419 = vunpack.c.l.b16 %v121
    %v420 = vunpack.c.h.b16 %v121
    %v421 = vunpack.c.l.b16 %v122
    %v422 = vunpack.c.h.b16 %v122
    %v423 = vunpack.c.l.b16 %v123
    %v424 = vunpack.c.h.b16 %v123
    %v425 = vunpack.c.l.b16 %v124
    %v426 = vunpack.c.h.b16 %v124
    %v427 = vunpack.c.l.b16 %v125
    %v428 = vunpack.c.h.b16 %v125
    %v429 = vunpack.c.l.b16 %v126
    %v430 = vunpack.c.h.b16 %v126
    %v431 = vunpack.c.l.b16 %v127
    %v432 = vunpack.c.h.b16 %v127
    %v433 = vunpack.c.l.b16 %v128
    %v434 = vunpack.c.h.b16 %v128
    %v435 = vunpack.c.l.b16 %v129
    %v436 = vunpack.c.h.b16 %v129
    %v437 = vunpack.c.l.b16 %v130
    %v438 = vunpack.c.h.b16 %v130
    %v439 = vunpack.c.l.b16 %v131
    %v440 = vunpack.c.h.b16 %v131
    %v441 = vunpack.c.l.b16 %v132
    %v442 = vunpack.c.h.b16 %v132
    %v443 = vunpack.c.l.b16 %v133
    %v444 = vunpack.c.h.b16 %v133
    %v445 = vunpack.c.l.b16 %v134
    %v446 = vunpack.c.h.b16 %v134
    %v447 = vunpack.c.l.b16 %v135
    %v448 = vunpack.c.h.b16 %v135
    %v449 = vunpack.c.l.b16 %v136
    %v450 = vunpack.c.h.b16 %v136
    %v451 = vunpack.c.l.b16 %v137
    %v452 = vunpack.c.h.b16 %v137
    %v453 = vunpack.c.l.b16 %v138
    %v454 = vunpack.c.h.b16 %v138
    %v455 = vunpack.c.l.b16 %v139
    %v456 = vunpack.c.h.b16 %v139
    %v457 = vunpack.c.l.b16 %v140
    %v458 = vunpack.c.h.b16 %v140
    %v459 = vunpack.c.l.b16 %v141
    %v460 = vunpack.c.h.b16 %v141
    %v461 = vunpack.c.l.b16 %v142
    %v462 = vunpack.c.h.b16 %v142
    %v463 = vunpack.c.l.b16 %v143
    %v464 = vunpack.c.h.b16 %v143
    %v465 = vunpack.c.l.b16 %v144
    %v466 = vunpack.c.h.b16 %v144
    %v467 = vunpack.c.l.b16 %v145
    %v468 = vunpack.c.h.b16 %v145
    %v469 = vunpack.c.l.b16 %v146
    %v470 = vunpack.c.h.b16 %v146
    %v471 = vunpack.c.l.b16 %v147
    %v472 = vunpack.c.h.b16 %v147
    %v473 = vunpack.c.l.b16 %v148
    %v474 = vunpack.c.h.b16 %v148
    %v475 = vunpack.c.l.b16 %v149
    %v476 = vunpack.c.h.b16 %v149
    %v477 = vunpack.c.l.b16 %v150
    %v478 = vunpack.c.h.b16 %v150
    %v479 = vunpack.c.l.b16 %v151
    %v480 = vunpack.c.h.b16 %v151
    %v481 = vunpack.c.l.b16 %v152
    %v482 = vunpack.c.h.b16 %v152
    %v483 = vunpack.c.l.b16 %v153
    %v484 = vunpack.c.h.b16 %v153
    %v485 = vunpack.c.l.b16 %v154
    %v486 = vunpack.c.h.b16 %v154
    %v487 = vunpack.c.l.b16 %v155
    %v488 = vunpack.c.h.b16 %v155
    %v489 = vunpack.c.l.b16 %v156
    %v490 = vunpack.c.h.b16 %v156
    %v491 = vunpack.c.l.b16 %v157
    %v492 = vunpack.c.h.b16 %v157
    %v493 = vunpack.c.l.b16 %v158
    %v494 = vunpack.c.h.b16 %v158
    %v495 = vunpack.c.l.b16 %v159
    %v496 = vunpack.c.h.b16 %v159
    %v497 = vunpack.c.l.b16 %v160
    %v498 = vunpack.c.h.b16 %v160
    %v499 = vunpack.c.l.b16 %v161
    %v500 = vunpack.c.h.b16 %v161
    %v501 = vunpack.c.l.b16 %v162
    %v502 = vunpack.c.h.b16 %v162
    %v503 = vunpack.c.l.b16 %v163
    %v504 = vunpack.c.h.b16 %v163
    %v505 = vunpack.c.l.b16 %v164
    %v506 = vunpack.c.h.b16 %v164
    %v507 = vunpack.c.l.b16 %v165
    %v508 = vunpack.c.h.b16 %v165
    %v509 = vunpack.c.l.b16 %v166
    %v510 = vunpack.c.h.b16 %v166
    %v511 = vunpack.c.l.b16 %v167
    %v512 = vunpack.c.h.b16 %v167
    %v513 = vunpack.c.l.b16 %v168
    %v514 = vunpack.c.h.b16 %v168
    %v515 = vunpack.c.l.b16 %v169
    %v516 = vunpack.c.h.b16 %v169
    %v517 = vunpack.c.l.b16 %v170
    %v518 = vunpack.c.h.b16 %v170
    %v519 = vunpack.c.l.b16 %v171
    %v520 = vunpack.c.h.b16 %v171
    %v521 = vunpack.c.l.b16 %v172
    %v522 = vunpack.c.h.b16 %v172
    %v523 = vunpack.c.l.b16 %v173
    %v524 = vunpack.c.h.b16 %v173
    %v525 = vunpack.c.l.b16 %v174
    %v526 = vunpack.c.h.b16 %v174
    %v527 = vunpack.c.l.b16 %v175
    %v528 = vunpack.c.h.b16 %v175
    %v529 = vunpack.c.l.b16 %v176
    %v530 = vunpack.c.h.b16 %v176
    %v531 = vunpack.c.l.b16 %v177
    %v532 = vunpack.c.h.b16 %v177
    %v533 = vunpack.c.l.b16 %v178
    %v534 = vunpack.c.h.b16 %v178
    %v535 = vunpack.c.l.b16 %v179
    %v536 = vunpack.c.h.b16 %v179
    %v537 = vunpack.c.l.b16 %v180
    %v538 = vunpack.c.h.b16 %v180
    %v539 = vunpack.c.l.b16 %v181
    %v540 = vunpack.c.h.b16 %v181
    %v541 = vunpack.c.l.b16 %v182
    %v542 = vunpack.c.h.b16 %v182
    %v543 = vunpack.c.l.b16 %v183
    %v544 = vunpack.c.h.b16 %v183
    %v545 = vunpack.c.l.b16 %v184
    %v546 = vunpack.c.h.b16 %v184
    %v547 = vunpack.c.l.b16 %v185
    %v548 = vunpack.c.h.b16 %v185
    %v549 = vunpack.c.l.b16 %v186
    %v550 = vunpack.c.h.b16 %v186
    %v551 = vunpack.c.l.b16 %v187
    %v552 = vunpack.c.h.b16 %v187
    %v553 = vunpack.c.l.b16 %v188
    %v554 = vunpack.c.h.b16 %v188
    %v555 = vunpack.c.l.b16 %v189
    %v556 = vunpack.c.h.b16 %v189
    %v557 = vunpack.c.l.b16 %v190
    %v558 = vunpack.c.h.b16 %v190
    %v559 = vunpack.c.l.b16 %v191
    %v560 = vunpack.c.h.b16 %v191
    %v561 = vunpack.c.l.b16 %v192
    %v562 = vunpack.c.h.b16 %v192
    %v563 = vunpack.c.l.b16 %v193
    %v564 = vunpack.c.h.b16 %v193
    %v565 = vunpack.c.l.b16 %v194
    %v566 = vunpack.c.h.b16 %v194
    %v567 = vunpack.c.l.b16 %v195
    %v568 = vunpack.c.h.b16 %v195
    %v569 = vunpack.c.l.b16 %v196
    %v570 = vunpack.c.h.b16 %v196
    %v571 = vunpack.c.l.b16 %v197
    %v572 = vunpack.c.h.b16 %v197
    %v573 = vunpack.c.l.b16 %v198
    %v574 = vunpack.c.h.b16 %v198
    %v575 = vunpack.c.l.b16 %v199
    %v576 = vunpack.c.h.b16 %v199
    %v577 = vunpack.c.l.b16 %v200
    %v578 = vunpack.c.h.b16 %v200
    %v579 = vunpack.c.l.b16 %v201
    %v580 = vunpack.c.h.b16 %v201
    %v581 = vunpack.c.l.b16 %v202
    %v582 = vunpack.c.h.b16 %v202
    %v583 = vunpack.c.l.b16 %v203
    %v584 = vunpack.c.h.b16 %v203
    %v585 = vunpack.c.l.b16 %v204
    %v586 = vunpack.c.h.b16 %v204
    %v587 = vunpack.c.l.b16 %v205
    %v588 = vunpack.c.h.b16 %v205
    %v589 = vunpack.c.l.b16 %v206
    %v590 = vunpack.c.h.b16 %v206
    %v591 = vunpack.c.l.b16 %v207
    %v592 = vunpack.c.h.b16 %v207
    %v593 = vunpack.c.l.b16 %v208
    %v594 = vunpack.c.h.b16 %v208
    %v595 = vunpack.c.l.b16 %v209
    %v596 = vunpack.c.h.b16 %v209
    %v597 = vunpack.c.l.b16 %v210
    %v598 = vunpack.c.h.b16 %v210
    %v599 = vunpack.c.l.b16 %v211
    %v600 = vunpack.c.h.b16 %v211
    %v601 = vunpack.c.l.b16 %v212
    %v602 = vunpack.c.h.b16 %v212
    %v603 = vpack.c.b16 %v349, %v347
    %v604 = vpack.c.b16 %v350, %v348
    %v605 = vpack.c.b16 %v353, %v351
    %v606 = vpack.c.b16 %v354, %v352
    %v607 = vpack.c.b16 %v357, %v355
    %v608 = vpack.c.b16 %v358, %v356
    %v609 = vpack.c.b16 %v361, %v359
    %v610 = vpack.c.b16 %v362, %v360
    %v611 = vpack.c.b16 %v365, %v363
    %v612 = vpack.c.b16 %v366, %v364
    %v613 = vpack.c.b16 %v369, %v367
    %v614 = vpack.c.b16 %v370, %v368
    %v615 = vpack.c.b16 %v373, %v371
    %v616 = vpack.c.b16 %v374, %v372
    %v617 = vpack.c.b16 %v377, %v375
    %v618 = vpack.c.b16 %v378, %v376
    %v619 = vpack.c.b16 %v381, %v379
    %v620 = vpack.c.b16 %v382, %v380
    %v621 = vpack.c.b16 %v385, %v383
    %v622 = vpack.c.b16 %v386, %v384
    %v623 = vpack.c.b16 %v389, %v387
    %v624 = vpack.c.b16 %v390, %v388
    %v625 = vpack.c.b16 %v393, %v391
    %v626 = vpack.c.b16 %v394, %v392
    %v627 = vpack.c.b16 %v397, %v395
    %v628 = vpack.c.b16 %v398, %v396
    %v629 = vpack.c.b16 %v401, %v399
    %v630 = vpack.c.b16 %v402, %v400
    %v631 = vpack.c.b16 %v405, %v403
    %v632 = vpack.c.b16 %v406, %v404
    %v633 = vpack.c.b16 %v409, %v407
    %v634 = vpack.c.b16 %v410, %v408
    %v635 = vpack.c.b16 %v413, %v411
    %v636 = vpack.c.b16 %v414, %v412
    %v637 = vpack.c.b16 %v417, %v415
    %v638 = vpack.c.b16 %v418, %v416
    %v639 = vpack.c.b16 %v421, %v419
    %v640 = vpack.c.b16 %v422, %v420
    %v641 = vpack.c.b16 %v425, %v423
    %v642 = vpack.c.b16 %v426, %v424
    %v643 = vpack.c.b16 %v429, %v427
    %v644 = vpack.c.b16 %v430, %v428
    %v645 = vpack.c.b16 %v433, %v431
    %v646 = vpack.c.b16 %v434, %v432
    %v647 = vpack.c.b16 %v437, %v435
    %v648 = vpack.c.b16 %v438, %v436
    %v649 = vpack.c.b16 %v441, %v439
    %v650 = vpack.c.b16 %v442, %v440
    %v651 = vpack.c.b16 %v445, %v443
    %v652 = vpack.c.b16 %v446, %v444
    %v653 = vpack.c.b16 %v449, %v447
    %v654 = vpack.c.b16 %v450, %v448
    %v655 = vpack.c.b16 %v453, %v451
    %v656 = vpack.c.b16 %v454, %v452
    %v657 = vpack.c.b16 %v457, %v455
    %v658 = vpack.c.b16 %v458, %v456
    %v659 = vpack.c.b16 %v461, %v459
    %v660 = vpack.c.b16 %v462, %v460
    %v661 = vpack.c.b16 %v465, %v463
    %v662 = vpack.c.b16 %v466, %v464
    %v663 = vpack.c.b16 %v469, %v467
    %v664 = vpack.c.b16 %v470, %v468
    %v665 = vpack.c.b16 %v473, %v471
    %v666 = vpack.c.b16 %v474, %v472
    %v667 = vpack.c.b16 %v477, %v475
    %v668 = vpack.c.b16 %v478, %v476
    %v669 = vpack.c.b16 %v481, %v479
    %v670 = vpack.c.b16 %v482, %v480
    %v671 = vpack.c.b16 %v485, %v483
    %v672 = vpack.c.b16 %v486, %v484
    %v673 = vpack.c.b16 %v489, %v487
    %v674 = vpack.c.b16 %v490, %v488
    %v675 = vpack.c.b16 %v493, %v491
    %v676 = vpack.c.b16 %v494, %v492
    %v677 = vpack.c.b16 %v497, %v495
    %v678 = vpack.c.b16 %v498, %v496
    %v679 = vpack.c.b16 %v501, %v499
    %v680 = vpack.c.b16 %v502, %v500
    %v681 = vpack.c.b16 %v505, %v503
    %v682 = vpack.c.b16 %v506, %v504
    %v683 = vpack.c.b16 %v509, %v507
    %v684 = vpack.c.b16 %v510, %v508
    %v685 = vpack.c.b16 %v513, %v511
    %v686 = vpack.c.b16 %v514, %v512
    %v687 = vpack.c.b16 %v517, %v515
    %v688 = vpack.c.b16 %v518, %v516
    %v689 = vpack.c.b16 %v521, %v519
    %v690 = vpack.c.b16 %v522, %v520
    %v691 = vpack.c.b16 %v525, %v523
    %v692 = vpack.c.b16 %v526, %v524
    %v693 = vpack.c.b16 %v529, %v527
    %v694 = vpack.c.b16 %v530, %v528
    %v695 = vpack.c.b16 %v533, %v531
    %v696 = vpack.c.b16 %v534, %v532
    %v697 = vpack.c.b16 %v537, %v535
    %v698 = vpack.c.b16 %v538, %v536
    %v699 = vpack.c.b16 %v541, %v539
    %v700 = vpack.c.b16 %v542, %v540
    %v701 = vpack.c.b16 %v545, %v543
    %v702 = vpack.c.b16 %v546, %v544
    %v703 = vpack.c.b16 %v549, %v547
    %v704 = vpack.c.b16 %v550, %v548
    %v705 = vpack.c.b16 %v553, %v551
    %v706 = vpack.c.b16 %v554, %v552
    %v707 = vpack.c.b16 %v557, %v555
    %v708 = vpack.c.b16 %v558, %v556
    %v709 = vpack.c.b16 %v561, %v559
    %v710 = vpack.c.b16 %v562, %v560
    %v711 = vpack.c.b16 %v565, %v563
    %v712 = vpack.c.b16 %v566, %v564
    %v713 = vpack.c.b16 %v569, %v567
    %v714 = vpack.c.b16 %v570, %v568
    %v715 = vpack.c.b16 %v573, %v571
    %v716 = vpack.c.b16 %v574, %v572
    %v717 = vpack.c.b16 %v577, %v575
    %v718 = vpack.c.b16 %v578, %v576
    %v719 = vpack.c.b16 %v581, %v579
    %v720 = vpack.c.b16 %v582, %v580
    %v721 = vpack.c.b16 %v585, %v583
    %v722 = vpack.c.b16 %v586, %v584
    %v723 = vpack.c.b16 %v589, %v587
    %v724 = vpack.c.b16 %v590, %v588
    %v725 = vpack.c.b16 %v593, %v591
    %v726 = vpack.c.b16 %v594, %v592
    %v727 = vpack.c.b16 %v597, %v595
    %v728 = vpack.c.b16 %v598, %v596
    %v729 = vpack.c.b16 %v601, %v599
    %v730 = vpack.c.b16 %v602, %v600
    %859 = vmatpush.bf16.msra.mxu0 %v617
    %860 = vmatpush.bf16.msra.mxu0 %v615
    %861 = vmatpush.bf16.msra.mxu0 %v613
    %862 = vmatpush.bf16.msra.mxu0 %v611
    %863 = vmatpush.bf16.msra.mxu0 %v609
    %864 = vmatpush.bf16.msra.mxu0 %v607
    %865 = vmatpush.bf16.msra.mxu0 %v605
    %866 = vmatpush.bf16.msra.mxu0 %v603
    %867 = vmatmul.bf16.gmra.mxu0 %v77
    %v868 = vpop.f32.mrf.mxu0
    %v869 = vadd.f32 %v215, %v868
    %v870 = vpop.f32.mrf.mxu0
    %871 = vdwg.mxu0
    %872 = vmatpush.bf16.msra.mxu0 %v633
    %873 = vmatpush.bf16.msra.mxu0 %v631
    %874 = vmatpush.bf16.msra.mxu0 %v629
    %875 = vmatpush.bf16.msra.mxu0 %v627
    %876 = vmatpush.bf16.msra.mxu0 %v625
    %877 = vmatpush.bf16.msra.mxu0 %v623
    %878 = vmatpush.bf16.msra.mxu0 %v621
    %879 = vmatpush.bf16.msra.mxu0 %v619
    %880 = vmatmul.bf16.gmra.mxu0 %v78
    %v881 = vpop.f32.mrf.mxu0
    %v882 = vadd.f32 %v869, %v881
    %v883 = vpop.f32.mrf.mxu0
    %884 = vdwg.mxu0
    %885 = vmatpush.bf16.msra.mxu0 %v649
    %886 = vmatpush.bf16.msra.mxu0 %v647
    %887 = vmatpush.bf16.msra.mxu0 %v645
    %888 = vmatpush.bf16.msra.mxu0 %v643
    %889 = vmatpush.bf16.msra.mxu0 %v641
    %890 = vmatpush.bf16.msra.mxu0 %v639
    %891 = vmatpush.bf16.msra.mxu0 %v637
    %892 = vmatpush.bf16.msra.mxu0 %v635
    %893 = vmatmul.bf16.gmra.mxu0 %v79
    %v894 = vpop.f32.mrf.mxu0
    %v895 = vadd.f32 %v882, %v894
    %v896 = vpop.f32.mrf.mxu0
    %897 = vdwg.mxu0
    %898 = vmatpush.bf16.msra.mxu0 %v665
    %899 = vmatpush.bf16.msra.mxu0 %v663
    %900 = vmatpush.bf16.msra.mxu0 %v661
    %901 = vmatpush.bf16.msra.mxu0 %v659
    %902 = vmatpush.bf16.msra.mxu0 %v657
    %903 = vmatpush.bf16.msra.mxu0 %v655
    %904 = vmatpush.bf16.msra.mxu0 %v653
    %905 = vmatpush.bf16.msra.mxu0 %v651
    %906 = vmatmul.bf16.gmra.mxu0 %v80
    %v907 = vpop.f32.mrf.mxu0
    %v908 = vadd.f32 %v895, %v907
    %v909 = vpop.f32.mrf.mxu0
    %910 = vdwg.mxu0
    %911 = vmatpush.bf16.msra.mxu0 %v681
    %912 = vmatpush.bf16.msra.mxu0 %v679
    %913 = vmatpush.bf16.msra.mxu0 %v677
    %914 = vmatpush.bf16.msra.mxu0 %v675
    %915 = vmatpush.bf16.msra.mxu0 %v673
    %916 = vmatpush.bf16.msra.mxu0 %v671
    %917 = vmatpush.bf16.msra.mxu0 %v669
    %918 = vmatpush.bf16.msra.mxu0 %v667
    %919 = vmatmul.bf16.gmra.mxu0 %v81
    %v920 = vpop.f32.mrf.mxu0
    %v921 = vadd.f32 %v908, %v920
    %v922 = vpop.f32.mrf.mxu0
    %923 = vdwg.mxu0
    %924 = vmatpush.bf16.msra.mxu0 %v697
    %925 = vmatpush.bf16.msra.mxu0 %v695
    %926 = vmatpush.bf16.msra.mxu0 %v693
    %927 = vmatpush.bf16.msra.mxu0 %v691
    %928 = vmatpush.bf16.msra.mxu0 %v689
    %929 = vmatpush.bf16.msra.mxu0 %v687
    %930 = vmatpush.bf16.msra.mxu0 %v685
    %931 = vmatpush.bf16.msra.mxu0 %v683
    %932 = vmatmul.bf16.gmra.mxu0 %v82
    %v933 = vpop.f32.mrf.mxu0
    %v934 = vadd.f32 %v921, %v933
    %v935 = vpop.f32.mrf.mxu0
    %936 = vdwg.mxu0
    %937 = vmatpush.bf16.msra.mxu0 %v713
    %938 = vmatpush.bf16.msra.mxu0 %v711
    %939 = vmatpush.bf16.msra.mxu0 %v709
    %940 = vmatpush.bf16.msra.mxu0 %v707
    %941 = vmatpush.bf16.msra.mxu0 %v705
    %942 = vmatpush.bf16.msra.mxu0 %v703
    %943 = vmatpush.bf16.msra.mxu0 %v701
    %944 = vmatpush.bf16.msra.mxu0 %v699
    %945 = vmatmul.bf16.gmra.mxu0 %v83
    %v946 = vpop.f32.mrf.mxu0
    %v947 = vadd.f32 %v934, %v946
    %v948 = vpop.f32.mrf.mxu0
    %949 = vdwg.mxu0
    %950 = vmatpush.bf16.msra.mxu0 %v729
    %951 = vmatpush.bf16.msra.mxu0 %v727
    %952 = vmatpush.bf16.msra.mxu0 %v725
    %953 = vmatpush.bf16.msra.mxu0 %v723
    %954 = vmatpush.bf16.msra.mxu0 %v721
    %955 = vmatpush.bf16.msra.mxu0 %v719
    %956 = vmatpush.bf16.msra.mxu0 %v717
    %957 = vmatpush.bf16.msra.mxu0 %v715
    %958 = vmatmul.bf16.gmra.mxu0 %v84
    %v959 = vpop.f32.mrf.mxu0
    %v960 = vadd.f32 %v947, %v959
    %v961 = vpop.f32.mrf.mxu0
    %962 = vdwg.mxu0
    %963 = vmatpush.bf16.msra.mxu0 %v618
    %964 = vmatpush.bf16.msra.mxu0 %v616
    %965 = vmatpush.bf16.msra.mxu0 %v614
    %966 = vmatpush.bf16.msra.mxu0 %v612
    %967 = vmatpush.bf16.msra.mxu0 %v610
    %968 = vmatpush.bf16.msra.mxu0 %v608
    %969 = vmatpush.bf16.msra.mxu0 %v606
    %970 = vmatpush.bf16.msra.mxu0 %v604
    %971 = vmatmul.bf16.gmra.mxu0 %v77
    %v972 = vpop.f32.mrf.mxu0
    %v973 = vadd.f32 %v216, %v972
    %v974 = vpop.f32.mrf.mxu0
    %975 = vdwg.mxu0
    %976 = vmatpush.bf16.msra.mxu0 %v634
    %977 = vmatpush.bf16.msra.mxu0 %v632
    %978 = vmatpush.bf16.msra.mxu0 %v630
    %979 = vmatpush.bf16.msra.mxu0 %v628
    %980 = vmatpush.bf16.msra.mxu0 %v626
    %981 = vmatpush.bf16.msra.mxu0 %v624
    %982 = vmatpush.bf16.msra.mxu0 %v622
    %983 = vmatpush.bf16.msra.mxu0 %v620
    %984 = vmatmul.bf16.gmra.mxu0 %v78
    %v985 = vpop.f32.mrf.mxu0
    %v986 = vadd.f32 %v973, %v985
    %v987 = vpop.f32.mrf.mxu0
    %988 = vdwg.mxu0
    %989 = vmatpush.bf16.msra.mxu0 %v650
    %990 = vmatpush.bf16.msra.mxu0 %v648
    %991 = vmatpush.bf16.msra.mxu0 %v646
    %992 = vmatpush.bf16.msra.mxu0 %v644
    %993 = vmatpush.bf16.msra.mxu0 %v642
    %994 = vmatpush.bf16.msra.mxu0 %v640
    %995 = vmatpush.bf16.msra.mxu0 %v638
    %996 = vmatpush.bf16.msra.mxu0 %v636
    %997 = vmatmul.bf16.gmra.mxu0 %v79
    %v998 = vpop.f32.mrf.mxu0
    %v999 = vadd.f32 %v986, %v998
    %v1000 = vpop.f32.mrf.mxu0
    %1001 = vdwg.mxu0
    %1002 = vmatpush.bf16.msra.mxu0 %v666
    %1003 = vmatpush.bf16.msra.mxu0 %v664
    %1004 = vmatpush.bf16.msra.mxu0 %v662
    %1005 = vmatpush.bf16.msra.mxu0 %v660
    %1006 = vmatpush.bf16.msra.mxu0 %v658
    %1007 = vmatpush.bf16.msra.mxu0 %v656
    %1008 = vmatpush.bf16.msra.mxu0 %v654
    %1009 = vmatpush.bf16.msra.mxu0 %v652
    %1010 = vmatmul.bf16.gmra.mxu0 %v80
    %v1011 = vpop.f32.mrf.mxu0
    %v1012 = vadd.f32 %v999, %v1011
    %v1013 = vpop.f32.mrf.mxu0
    %1014 = vdwg.mxu0
    %1015 = vmatpush.bf16.msra.mxu0 %v682
    %1016 = vmatpush.bf16.msra.mxu0 %v680
    %1017 = vmatpush.bf16.msra.mxu0 %v678
    %1018 = vmatpush.bf16.msra.mxu0 %v676
    %1019 = vmatpush.bf16.msra.mxu0 %v674
    %1020 = vmatpush.bf16.msra.mxu0 %v672
    %1021 = vmatpush.bf16.msra.mxu0 %v670
    %1022 = vmatpush.bf16.msra.mxu0 %v668
    %1023 = vmatmul.bf16.gmra.mxu0 %v81
    %v1024 = vpop.f32.mrf.mxu0
    %v1025 = vadd.f32 %v1012, %v1024
    %v1026 = vpop.f32.mrf.mxu0
    %1027 = vdwg.mxu0
    %1028 = vmatpush.bf16.msra.mxu0 %v698
    %1029 = vmatpush.bf16.msra.mxu0 %v696
    %1030 = vmatpush.bf16.msra.mxu0 %v694
    %1031 = vmatpush.bf16.msra.mxu0 %v692
    %1032 = vmatpush.bf16.msra.mxu0 %v690
    %1033 = vmatpush.bf16.msra.mxu0 %v688
    %1034 = vmatpush.bf16.msra.mxu0 %v686
    %1035 = vmatpush.bf16.msra.mxu0 %v684
    %1036 = vmatmul.bf16.gmra.mxu0 %v82
    %v1037 = vpop.f32.mrf.mxu0
    %v1038 = vadd.f32 %v1025, %v1037
    %v1039 = vpop.f32.mrf.mxu0
    %1040 = vdwg.mxu0
    %1041 = vmatpush.bf16.msra.mxu0 %v714
    %1042 = vmatpush.bf16.msra.mxu0 %v712
    %1043 = vmatpush.bf16.msra.mxu0 %v710
    %1044 = vmatpush.bf16.msra.mxu0 %v708
    %1045 = vmatpush.bf16.msra.mxu0 %v706
    %1046 = vmatpush.bf16.msra.mxu0 %v704
    %1047 = vmatpush.bf16.msra.mxu0 %v702
    %1048 = vmatpush.bf16.msra.mxu0 %v700
    %1049 = vmatmul.bf16.gmra.mxu0 %v83
    %v1050 = vpop.f32.mrf.mxu0
    %v1051 = vadd.f32 %v1038, %v1050
    %v1052 = vpop.f32.mrf.mxu0
    %1053 = vdwg.mxu0
    %1054 = vmatpush.bf16.msra.mxu0 %v730
    %1055 = vmatpush.bf16.msra.mxu0 %v728
    %1056 = vmatpush.bf16.msra.mxu0 %v726
    %1057 = vmatpush.bf16.msra.mxu0 %v724
    %1058 = vmatpush.bf16.msra.mxu0 %v722
    %1059 = vmatpush.bf16.msra.mxu0 %v720
    %1060 = vmatpush.bf16.msra.mxu0 %v718
    %1061 = vmatpush.bf16.msra.mxu0 %v716
    %1062 = vmatmul.bf16.gmra.mxu0 %v84
    %v1063 = vpop.f32.mrf.mxu0
    %v1064 = vadd.f32 %v1051, %v1063
    %v1065 = vpop.f32.mrf.mxu0
    %1066 = vdwg.mxu0
    %v1067 = vmax.f32 %v960, 0.0
    %v1068 = vmax.f32 %v1064, 0.0
    %v1069 = vpack.c.bf16 %v1067, %v1067
    %v1070 = vpack.c.bf16 %v1068, %v1068
    %v1071 = vld [vmem:[#allocation7] sm:$0xf]
    %v1072 = vld [vmem:[#allocation7 + $0x4] sm:$0xf]
    %v1073 = vld [vmem:[#allocation7 + $0x8] sm:$0xf]
    %v1074 = vld [vmem:[#allocation7 + $0xc] sm:$0xf]
    %v1075 = vld [vmem:[#allocation7 + $0x10] sm:$0xf]
    %v1076 = vld [vmem:[#allocation7 + $0x14] sm:$0xf]
    %v1077 = vld [vmem:[#allocation7 + $0x18] sm:$0xf]
    %v1078 = vld [vmem:[#allocation7 + $0x1c] sm:$0xf]
    %v1079 = vld [vmem:[#allocation7 + $0x20] sm:$0xf]
    %v1080 = vld [vmem:[#allocation7 + $0x24] sm:$0xf]
    %v1081 = vld [vmem:[#allocation7 + $0x28] sm:$0xf]
    %v1082 = vld [vmem:[#allocation7 + $0x2c] sm:$0xf]
    %v1083 = vld [vmem:[#allocation7 + $0x30] sm:$0xf]
    %v1084 = vld [vmem:[#allocation7 + $0x34] sm:$0xf]
    %v1085 = vld [vmem:[#allocation7 + $0x38] sm:$0xf]
    %v1086 = vld [vmem:[#allocation7 + $0x3c] sm:$0xf]
    %v1087 = vld [vmem:[#allocation7 + $0x40] sm:$0xf]
    %v1088 = vld [vmem:[#allocation7 + $0x44] sm:$0xf]
    %v1089 = vld [vmem:[#allocation7 + $0x48] sm:$0xf]
    %v1090 = vld [vmem:[#allocation7 + $0x4c] sm:$0xf]
    %v1091 = vld [vmem:[#allocation7 + $0x50] sm:$0xf]
    %v1092 = vld [vmem:[#allocation7 + $0x54] sm:$0xf]
    %v1093 = vld [vmem:[#allocation7 + $0x58] sm:$0xf]
    %v1094 = vld [vmem:[#allocation7 + $0x5c] sm:$0xf]
    %v1095 = vld [vmem:[#allocation7 + $0x60] sm:$0xf]
    %v1096 = vld [vmem:[#allocation7 + $0x64] sm:$0xf]
    %v1097 = vld [vmem:[#allocation7 + $0x68] sm:$0xf]
    %v1098 = vld [vmem:[#allocation7 + $0x6c] sm:$0xf]
    %v1099 = vld [vmem:[#allocation7 + $0x70] sm:$0xf]
    %v1100 = vld [vmem:[#allocation7 + $0x74] sm:$0xf]
    %v1101 = vld [vmem:[#allocation7 + $0x78] sm:$0xf]
    %v1102 = vld [vmem:[#allocation7 + $0x7c] sm:$0xf]
    %v1103 = vld [vmem:[%s4] sm:$0x1]
    %v1105 = vperm.slane %v1103, 0
    %v1139 = vunpack.c.l.b16 %v1071
    %v1140 = vunpack.c.l.b16 %v1072
    %v1141 = vunpack.c.l.b16 %v1073
    %v1142 = vunpack.c.l.b16 %v1074
    %v1143 = vunpack.c.l.b16 %v1075
    %v1144 = vunpack.c.l.b16 %v1076
    %v1145 = vunpack.c.l.b16 %v1077
    %v1146 = vunpack.c.l.b16 %v1078
    %v1147 = vunpack.c.l.b16 %v1079
    %v1148 = vunpack.c.l.b16 %v1080
    %v1149 = vunpack.c.l.b16 %v1081
    %v1150 = vunpack.c.l.b16 %v1082
    %v1151 = vunpack.c.l.b16 %v1083
    %v1152 = vunpack.c.l.b16 %v1084
    %v1153 = vunpack.c.l.b16 %v1085
    %v1154 = vunpack.c.l.b16 %v1086
    %v1155 = vunpack.c.l.b16 %v1087
    %v1156 = vunpack.c.l.b16 %v1088
    %v1157 = vunpack.c.l.b16 %v1089
    %v1158 = vunpack.c.l.b16 %v1090
    %v1159 = vunpack.c.l.b16 %v1091
    %v1160 = vunpack.c.l.b16 %v1092
    %v1161 = vunpack.c.l.b16 %v1093
    %v1162 = vunpack.c.l.b16 %v1094
    %v1163 = vunpack.c.l.b16 %v1095
    %v1164 = vunpack.c.l.b16 %v1096
    %v1165 = vunpack.c.l.b16 %v1097
    %v1166 = vunpack.c.l.b16 %v1098
    %v1167 = vunpack.c.l.b16 %v1099
    %v1168 = vunpack.c.l.b16 %v1100
    %v1169 = vunpack.c.l.b16 %v1101
    %v1170 = vunpack.c.l.b16 %v1102
    %v1171 = vpack.c.b16 %v1140, %v1139
    %v1172 = vpack.c.b16 %v1142, %v1141
    %v1173 = vpack.c.b16 %v1144, %v1143
    %v1174 = vpack.c.b16 %v1146, %v1145
    %v1175 = vpack.c.b16 %v1148, %v1147
    %v1176 = vpack.c.b16 %v1150, %v1149
    %v1177 = vpack.c.b16 %v1152, %v1151
    %v1178 = vpack.c.b16 %v1154, %v1153
    %v1179 = vpack.c.b16 %v1156, %v1155
    %v1180 = vpack.c.b16 %v1158, %v1157
    %v1181 = vpack.c.b16 %v1160, %v1159
    %v1182 = vpack.c.b16 %v1162, %v1161
    %v1183 = vpack.c.b16 %v1164, %v1163
    %v1184 = vpack.c.b16 %v1166, %v1165
    %v1185 = vpack.c.b16 %v1168, %v1167
    %v1186 = vpack.c.b16 %v1170, %v1169
    %1203 = vmatpush.bf16.msra.mxu0 %v1178
    %1204 = vmatpush.bf16.msra.mxu0 %v1177
    %1205 = vmatpush.bf16.msra.mxu0 %v1176
    %1206 = vmatpush.bf16.msra.mxu0 %v1175
    %1207 = vmatpush.bf16.msra.mxu0 %v1174
    %1208 = vmatpush.bf16.msra.mxu0 %v1173
    %1209 = vmatpush.bf16.msra.mxu0 %v1172
    %1210 = vmatpush.bf16.msra.mxu0 %v1171
    %1211 = vmatmul.bf16.gmra.mxu0 %v1069
    %v1212 = vpop.f32.mrf.mxu0
    %v1213 = vadd.f32 %v1105, %v1212
    %v1214 = vpop.f32.mrf.mxu0
    %1215 = vdwg.mxu0
    %1216 = vmatpush.bf16.msra.mxu0 %v1186
    %1217 = vmatpush.bf16.msra.mxu0 %v1185
    %1218 = vmatpush.bf16.msra.mxu0 %v1184
    %1219 = vmatpush.bf16.msra.mxu0 %v1183
    %1220 = vmatpush.bf16.msra.mxu0 %v1182
    %1221 = vmatpush.bf16.msra.mxu0 %v1181
    %1222 = vmatpush.bf16.msra.mxu0 %v1180
    %1223 = vmatpush.bf16.msra.mxu0 %v1179
    %1224 = vmatmul.bf16.gmra.mxu0 %v1070
    %v1225 = vpop.f32.mrf.mxu0
    %v1226 = vadd.f32 %v1213, %v1225
    %v1227 = vpop.f32.mrf.mxu0
    %1228 = vdwg.mxu0
    %v1229 = vlaneseq
    %v1230 = vand.u32 %v1229, 127
    %vm1231 = vcmp.lt.s32.totalorder %v1230, 8
    %v1232 = vsel %vm1231, %v1226, -1e+30
    %1233 = vmax.xlane.f32.xlu0 %v1232
    %v1234 = vpop.xlane.xlu0 %1233
    %v1235 = vsub.f32 %v1226, %v1234
    %v1236 = vmul.f32 %v1235, 1.442695
    %v1237 = vpow.pop %v1236
    %v1238 = vsel %vm1231, %v1237, 0.0
    %1239 = vadd.xlane.f32.xlu0 %v1238
    %v1240 = vpop.xlane.xlu0 %1239
    %v1241 = vlog2.pop %v1240
    %v1242 = vmul.f32 %v1241, 0.6931472
    %v1243 = vadd.f32 %v1234, %v1242
    %v1244 = vld [vmem:[%s5] sm:$0xff]
    %1245 = vset.pattern.permute.xlu0 0
    %1246 = vperm.xlu0 %1245, %v1244
    %v1247 = vpop.permute.xlu0 %1246
    %vm1248 = vcmp.eq.s32.totalorder %v1230, %v1247
    %v1249 = vsel %vm1248, %v1226, 0.0
    %1250 = vadd.xlane.f32.xlu0 %v1249
    %v1251 = vpop.xlane.xlu0 %1250
    %v1252 = vsub.f32 %v1243, %v1251
    %vm1253 = vcmp.eq.s32.totalorder %v1230, 8
    %v1254 = vsel %vm1253, 1, 0
    %v1255 = vcvt.s32.f32 %v1254
    %v1256 = vmul.f32 %v1252, %v1255
    %v1257 = vadd.f32 %v1226, %v1256
    %1258 = vst [vmem:[#allocation8] sm:$0xff] %v1257
    // Predicated region
    $region38: #{tpu_custom_call.1} parent=1 // pred_check
      _
    $region39: #{tpu_custom_call.1} parent=1 // pred_check_branch
      %1260 = sbr.rel (0) target = $region41
    $region40: #{tpu_custom_call.1} parent=1 // pred_region
      %1262 = vsyncadd [#allocation4], 0
      %s1264 = sshll.u32 [#allocation8], 4
      %s1265 = int_to_ptr.vmem [resolvable:$true] %s1264
      %s1266 = sshll.u32 %s6, 4
      %s1267 = int_to_ptr.hbm [resolvable:$true] %s1266
      %1269 = dma.vmem_to_hbm [thread:$0]  %s1265, 128, %s1267, [#allocation4]
    $region41: #{tpu_custom_call.1} parent=1 // pred_fallthru
      _
    // Predicated region
    $region42: #{tpu_custom_call.1} parent=1 // pred_check
      _
    $region43: #{tpu_custom_call.1} parent=1 // pred_check_branch
      %1271 = sbr.rel (0) target = $region45
    $region44: #{tpu_custom_call.1} parent=1 // pred_region
      %1273 = dma.done [#allocation4], 128
    $region45: #{tpu_custom_call.1} parent=1 // pred_fallthru
      _
    %1274 = vsyncpa [#allocation3], 1
    %1275 = vsyncpa [#allocation6], 1
    %1276 = vsyncpa [#allocation4], 1

</llo_original>
